<compile_context>
chip_gen: v7x
topology: tpu7x:2x2x1
jax: 0.10.0
libtpu: 0.0.40
codegen_flags: <defaults>
</compile_context>

<pallas_src>
import functools

import jax
import jax.numpy as jnp
from jax import lax
from jax.experimental import pallas as pl
from jax.experimental.pallas import tpu as pltpu


def _conv_stats_kernel(x_ref, w_ref, y_ref, stats_ref):
    """Phase 1: Conv1d(k=3, pad=1) as one K=3*Dp matmul + channel sum/sumsq.

    x_ref:     (L, Dp)       one batch element (channels-last, lane-dense)
    w_ref:     (3*Dp, Dp)    stacked weights [W0^T; W1^T; W2^T] (c_in, c_out)
    y_ref:     (L, Dp)       conv output (f32)
    stats_ref: (2, Dp)       row 0 = sum_l y, row 1 = sum_l y*y
    """
    x = x_ref[...]                                  # (L, Dp) f32
    L = x.shape[0]

    # Shifted taps via XLU roll + boundary mask (no concatenated copies of x
    # just for the shift; zero rows emulate the conv's padding=1).
    x_prev = pltpu.roll(x, shift=1, axis=0)         # x_prev[l] = x[l-1]
    x_next = pltpu.roll(x, shift=L - 1, axis=0)     # x_next[l] = x[l+1]
    row = lax.broadcasted_iota(jnp.int32, x.shape, 0)
    x_prev = jnp.where(row == 0, 0.0, x_prev)
    x_next = jnp.where(row == L - 1, 0.0, x_next)

    # One MXU matmul with contraction depth 3*Dp.
    x_cat = jnp.concatenate([x_prev, x, x_next], axis=-1)          # (L, 3*Dp)
    y = jnp.dot(x_cat, w_ref[...], preferred_element_type=jnp.float32)
    y_ref[...] = y

    # One-pass batch-norm statistics (sum and sum of squares).
    s = jnp.sum(y, axis=0, keepdims=True)                          # (1, Dp)
    ss = jnp.sum(y * y, axis=0, keepdims=True)                     # (1, Dp)
    stats_ref[...] = jnp.concatenate([s, ss], axis=0)              # (2, Dp)


def _norm_act_pool_kernel(y_ref, scale_ref, shift_ref, o_ref, *, pool):
    """Phase 2: y*scale + shift -> ELU -> MaxPool1d(pool) along L.

    y_ref:     (L, Dp)    conv output of one batch element
    scale_ref: (1, Dp)    gamma * rsqrt(var + eps)
    shift_ref: (1, Dp)    beta - mean * scale
    o_ref:     (Lo, Dp)   pooled output, Lo = L // pool
    """
    sc = scale_ref[...]
    sh = shift_ref[...]
    Lo = o_ref.shape[0]

    def act_slice(s):
        # Strided sublane read: rows s, s+pool, s+2*pool, ...  (no relayout,
        # never materializes the full activated tensor).
        y = y_ref[pl.ds(s, Lo, stride=pool), :]                    # (Lo, Dp)
        yn = y * sc + sh
        return jnp.where(yn > 0, yn, jnp.expm1(yn))                # ELU(alpha=1)

    pooled = act_slice(0)
    for s in range(1, pool):
        pooled = jnp.maximum(pooled, act_slice(s))
    o_ref[...] = pooled.astype(o_ref.dtype)


def downsample_layer(x, conv_w, conv_b, bn_gamma, bn_beta, *,
                     down_sample_scale, eps=1e-5):
    """x: (B, L, D) float; conv_w: (D, D, 3) PyTorch layout (c_out, c_in, k)."""
    B, L, D = x.shape
    pool = int(down_sample_scale)
    Lo = L // pool
    Dp = ((D + 127) // 128) * 128          # lane-dense channel dim

    x_p = jnp.pad(x.astype(jnp.float32), ((0, 0), (0, 0), (0, Dp - D)))

    # Stacked conv weights: rows [k*Dp:(k+1)*Dp] = W[:, :, k]^T (c_in, c_out),
    # padded channels are zero, matching lane order of [x[l-1], x[l], x[l+1]].
    w_t = jnp.transpose(conv_w.astype(jnp.float32), (2, 1, 0))     # (3, c_in, c_out)
    w_t = jnp.pad(w_t, ((0, 0), (0, Dp - D), (0, Dp - D)))
    w_cat = w_t.reshape(3 * Dp, Dp)

    # Conv bias is mathematically redundant under training-mode BatchNorm
    # (cancels in mean subtraction, does not change variance) -> folded away.
    del conv_b

    # ---------------- Phase 1: conv + per-batch channel stats ----------------
    y, stats = pl.pallas_call(
        _conv_stats_kernel,
        grid=(B,),
        in_specs=[
            pl.BlockSpec((None, L, Dp), lambda b: (b, 0, 0)),
            pl.BlockSpec((3 * Dp, Dp), lambda b: (0, 0)),   # resident weights
        ],
        out_specs=[
            pl.BlockSpec((None, L, Dp), lambda b: (b, 0, 0)),
            pl.BlockSpec((None, 2, Dp), lambda b: (b, 0, 0)),
        ],
        out_shape=[
            jax.ShapeDtypeStruct((B, L, Dp), jnp.float32),
            jax.ShapeDtypeStruct((B, 2, Dp), jnp.float32),
        ],
        compiler_params=pltpu.CompilerParams(
            dimension_semantics=("parallel",)),
        cost_estimate=pl.CostEstimate(
            flops=2 * B * L * 3 * Dp * Dp,
            transcendentals=0,
            bytes_accessed=4 * (2 * B * L * Dp + 3 * Dp * Dp + 2 * B * Dp),
        ),
    )(x_p, w_cat)

    # ------- Fold BatchNorm (batch stats, biased var) into scale/shift -------
    n = B * L
    tot = jnp.sum(stats, axis=0)                        # (2, Dp)
    mean = tot[0] / n
    var = jnp.maximum(tot[1] / n - mean * mean, 0.0)    # E[y^2] - E[y]^2
    g = jnp.pad(bn_gamma.astype(jnp.float32), (0, Dp - D))
    be = jnp.pad(bn_beta.astype(jnp.float32), (0, Dp - D))
    scale1 = g * lax.rsqrt(var + eps)
    shift1 = be - mean * scale1
    scale = scale1.reshape(1, Dp)
    shift = shift1.reshape(1, Dp)

    # ---------------- Phase 2: normalize + ELU + MaxPool ----------------
    kernel2 = functools.partial(_norm_act_pool_kernel, pool=pool)
    out_p = pl.pallas_call(
        kernel2,
        grid=(B,),
        in_specs=[
            pl.BlockSpec((None, L, Dp), lambda b: (b, 0, 0)),
            pl.BlockSpec((1, Dp), lambda b: (0, 0)),
            pl.BlockSpec((1, Dp), lambda b: (0, 0)),
        ],
        out_specs=pl.BlockSpec((None, Lo, Dp), lambda b: (b, 0, 0)),
        out_shape=jax.ShapeDtypeStruct((B, Lo, Dp), jnp.float32),
        compiler_params=pltpu.CompilerParams(
            dimension_semantics=("parallel",)),
        cost_estimate=pl.CostEstimate(
            flops=4 * B * L * Dp,
            transcendentals=B * L * Dp,
            bytes_accessed=4 * (B * L * Dp + B * Lo * Dp + 2 * Dp),
        ),
    )(y, scale, shift)

    return out_p[:, :, :D]       # strip channel padding


if __name__ == "__main__":
    B, L, D = 2, 16, 32
    down_sample_scale = 2

    key = jax.random.PRNGKey(0)
    kx, kw, kb = jax.random.split(key, 3)

    x = jax.random.normal(kx, (B, L, D), dtype=jnp.float32)

    # Conv1d(d_model, d_model, kernel_size=3) parameters (PyTorch-style init bound).
    fan_in = D * 3
    bound = 1.0 / (fan_in ** 0.5)
    conv_w = jax.random.uniform(kw, (D, D, 3), minval=-bound, maxval=bound,
                                dtype=jnp.float32)
    conv_b = jax.random.uniform(kb, (D,), minval=-bound, maxval=bound,
                                dtype=jnp.float32)

    # BatchNorm1d default affine init (gamma=1, beta=0); batch stats (train mode).
    bn_gamma = jnp.ones((D,), dtype=jnp.float32)
    bn_beta = jnp.zeros((D,), dtype=jnp.float32)

    out = downsample_layer(x, conv_w, conv_b, bn_gamma, bn_beta,
                           down_sample_scale=down_sample_scale)
    out = jax.block_until_ready(out)
    assert out.shape == (B, L // down_sample_scale, D), out.shape

    # Pure-JAX reference (includes the conv bias -> also validates the exact
    # bias/BN cancellation used by the kernel).
    xp = jnp.pad(x, ((0, 0), (1, 1), (0, 0)))
    y_ref = (
        jnp.einsum("bld,od->blo", xp[:, 0:L, :], conv_w[:, :, 0])
        + jnp.einsum("bld,od->blo", xp[:, 1:L + 1, :], conv_w[:, :, 1])
        + jnp.einsum("bld,od->blo", xp[:, 2:L + 2, :], conv_w[:, :, 2])
        + conv_b
    )
    m = jnp.mean(y_ref, axis=(0, 1), keepdims=True)
    v = jnp.mean((y_ref - m) ** 2, axis=(0, 1), keepdims=True)
    yn_ref = (y_ref - m) * lax.rsqrt(v + 1e-5) * bn_gamma + bn_beta
    a_ref = jnp.where(yn_ref > 0, yn_ref, jnp.expm1(yn_ref))
    Lo = L // down_sample_scale
    ref = jnp.max(
        a_ref[:, :Lo * down_sample_scale, :].reshape(B, Lo, down_sample_scale, D),
        axis=2)

    max_err = float(jnp.max(jnp.abs(out - ref)))
    assert jnp.allclose(out, ref, atol=1e-4, rtol=1e-4), max_err
    print("KERNEL_OK")
</pallas_src>

<mosaic_0001>
module attributes {stable_mosaic.version = 11 : i64} {
  func.func @_conv_stats_kernel(%arg0: i32, %arg1: memref<1x16x128xf32, #tpu.memory_space<vmem>>, %arg2: memref<384x128xf32, #tpu.memory_space<vmem>>, %arg3: memref<1x16x128xf32, #tpu.memory_space<vmem>>, %arg4: memref<1x2x128xf32, #tpu.memory_space<vmem>>) attributes {dimension_semantics = [#tpu.dimension_semantics<parallel>], iteration_bounds = array<i64: 2>, scalar_prefetch = 0 : i64, scratch_operands = 0 : i64, tpu.core_type = #tpu.core_type<tc>, window_params = [{transform_indices = @transform_0, window_bounds = array<i64: 1, 16, 128>}, {pipeline_mode = #tpu.pipeline_mode<synchronous>, transform_indices = @transform_1, window_bounds = array<i64: 384, 128>}, {transform_indices = @transform_2, window_bounds = array<i64: 1, 16, 128>}, {transform_indices = @transform_3, window_bounds = array<i64: 1, 2, 128>}]} {
    %c0 = arith.constant 0 : index
    %c0_0 = arith.constant 0 : index
    %c0_1 = arith.constant 0 : index
    %0 = vector.load %arg1[%c0, %c0_0, %c0_1] : memref<1x16x128xf32, #tpu.memory_space<vmem>>, vector<1x16x128xf32>
    %1 = vector.shape_cast %0 : vector<1x16x128xf32> to vector<16x128xf32>
    %c1_i32 = arith.constant 1 : i32
    %2 = tpu.dynamic_rotate %1 by %c1_i32 dim 0 : vector<16x128xf32>, i32 -> vector<16x128xf32>
    %c15_i32 = arith.constant 15 : i32
    %3 = tpu.dynamic_rotate %1 by %c15_i32 dim 0 : vector<16x128xf32>, i32 -> vector<16x128xf32>
    %4 = tpu.iota {dimensions = array<i32: 0>} : vector<16x128xi32>
    %c0_i32 = arith.constant 0 : i32
    %5 = vector.broadcast %c0_i32 : i32 to vector<16x128xi32>
    %6 = arith.cmpi eq, %4, %5 : vector<16x128xi32>
    %cst = arith.constant 0.000000e+00 : f32
    %7 = vector.broadcast %cst : f32 to vector<16x128xf32>
    %8 = arith.select %6, %7, %2 : vector<16x128xi1>, vector<16x128xf32>
    %c15_i32_2 = arith.constant 15 : i32
    %9 = vector.broadcast %c15_i32_2 : i32 to vector<16x128xi32>
    %10 = arith.cmpi eq, %4, %9 : vector<16x128xi32>
    %cst_3 = arith.constant 0.000000e+00 : f32
    %11 = vector.broadcast %cst_3 : f32 to vector<16x128xf32>
    %12 = arith.select %10, %11, %3 : vector<16x128xi1>, vector<16x128xf32>
    %13 = tpu.concatenate %8, %1, %12 in 1 : vector<16x128xf32>, vector<16x128xf32>, vector<16x128xf32> -> vector<16x384xf32>
    %c0_4 = arith.constant 0 : index
    %c0_5 = arith.constant 0 : index
    %14 = vector.load %arg2[%c0_4, %c0_5] : memref<384x128xf32, #tpu.memory_space<vmem>>, vector<384x128xf32>
    %cst_6 = arith.constant dense<0.000000e+00> : vector<16x128xf32>
    %15 = tpu.matmul %13, %14, %cst_6 {dimension_numbers = #tpu.dot_dimension_numbers<[1], [0], [0], [1], [0, 0, 1, 1], [], []>} : vector<16x384xf32>, vector<384x128xf32>, vector<16x128xf32> -> vector<16x128xf32>
    %c0_7 = arith.constant 0 : index
    %c0_8 = arith.constant 0 : index
    %c0_9 = arith.constant 0 : index
    %16 = vector.load %arg3[%c0_7, %c0_8, %c0_9] : memref<1x16x128xf32, #tpu.memory_space<vmem>>, vector<1x16x128xf32>
    %17 = vector.shape_cast %16 : vector<1x16x128xf32> to vector<16x128xf32>
    %18 = vector.shape_cast %15 : vector<16x128xf32> to vector<1x16x128xf32>
    tpu.vector_store %arg3[%c0_7, %c0_8, %c0_9], %18 {strides = array<i32>} : memref<1x16x128xf32, #tpu.memory_space<vmem>>, vector<1x16x128xf32>,
    %cst_10 = arith.constant dense<0.000000e+00> : vector<128xf32>
    %19 = vector.multi_reduction <add>, %15, %cst_10 [0] : vector<16x128xf32> to vector<128xf32>
    %20 = vector.shape_cast %19 : vector<128xf32> to vector<1x128xf32>
    %21 = arith.mulf %15, %15 : vector<16x128xf32>
    %cst_11 = arith.constant dense<0.000000e+00> : vector<128xf32>
    %22 = vector.multi_reduction <add>, %21, %cst_11 [0] : vector<16x128xf32> to vector<128xf32>
    %23 = vector.shape_cast %22 : vector<128xf32> to vector<1x128xf32>
    %24 = tpu.concatenate %20, %23 in 0 : vector<1x128xf32>, vector<1x128xf32> -> vector<2x128xf32>
    %c0_12 = arith.constant 0 : index
    %c0_13 = arith.constant 0 : index
    %c0_14 = arith.constant 0 : index
    %25 = vector.load %arg4[%c0_12, %c0_13, %c0_14] : memref<1x2x128xf32, #tpu.memory_space<vmem>>, vector<1x2x128xf32>
    %26 = vector.shape_cast %25 : vector<1x2x128xf32> to vector<2x128xf32>
    %27 = vector.shape_cast %24 : vector<2x128xf32> to vector<1x2x128xf32>
    tpu.vector_store %arg4[%c0_12, %c0_13, %c0_14], %27 {strides = array<i32>} : memref<1x2x128xf32, #tpu.memory_space<vmem>>, vector<1x2x128xf32>,
    return
  }
  func.func @transform_0(%arg0: i32) -> (i32, i32, i32) {
    %c0_i32 = arith.constant 0 : i32
    %c0_i32_0 = arith.constant 0 : i32
    %c0_i32_1 = arith.constant 0 : i32
    return %arg0, %c0_i32, %c0_i32_0 : i32, i32, i32
  }
  func.func @transform_1(%arg0: i32) -> (i32, i32) {
    %c0_i32 = arith.constant 0 : i32
    %c0_i32_0 = arith.constant 0 : i32
    %c0_i32_1 = arith.constant 0 : i32
    return %c0_i32, %c0_i32_0 : i32, i32
  }
  func.func @transform_2(%arg0: i32) -> (i32, i32, i32) {
    %c0_i32 = arith.constant 0 : i32
    %c0_i32_0 = arith.constant 0 : i32
    %c0_i32_1 = arith.constant 0 : i32
    return %arg0, %c0_i32, %c0_i32_0 : i32, i32, i32
  }
  func.func @transform_3(%arg0: i32) -> (i32, i32, i32) {
    %c0_i32 = arith.constant 0 : i32
    %c0_i32_0 = arith.constant 0 : i32
    %c0_i32_1 = arith.constant 0 : i32
    return %arg0, %c0_i32, %c0_i32_0 : i32, i32, i32
  }
}

</mosaic_0001>

<llo_original>
// kernel: tpu_custom_call.1
$region0: #{tpu_custom_call.1}
  #allocation0 [shape = 'u32[]', space=smem, size = 0x4, offset = 0x4, fixed_abs, tag = 'smem constant byte address 0x4 - core index']
  #allocation1 [shape = 'u32[144,128]{1,0:T(1,128)}', space=vmem, size = 0x12000, scoped, tag = 'internal scratch']
  %s0 = inlined_call_operand.hbm [shape: f32[2,16,128], index: 0, kind: input, shape index: {}]
  %s1 = inlined_call_operand.hbm [shape: f32[384,128], index: 1, kind: input, shape index: {}]
  %s2 = inlined_call_operand.hbm [shape: f32[2,16,128], index: 2, kind: output, shape index: {0}]
  %s3 = inlined_call_operand.hbm [shape: f32[2,2,128], index: 3, kind: output, shape index: {1}]
  %4 = xla_tuple %s2, %s3
  %s5 = sld [smem:[#allocation0]]
  $region57: #{tpu_custom_call.1} parent=0
    _
  %s7 = ssub.s32 1, %s5
  %s8 = scalar_select 0, %s7, %s5
  $region1: #{tpu_custom_call.1} parent=0
    #allocation2 [shape = 'u8[16384]{0}', space=vmem, size = 0x4000, scoped, tag = 'input window, operand 0']
    #allocation3 [shape = 's32[2]{0}', space=sflag, size = 0x8, scoped, tag = 'scoped memory for tpu_custom_call.1']
    #allocation4 [shape = 's32[2]{0}', space=sflag, size = 0x8, scoped, tag = 'scoped memory for tpu_custom_call.1']
    #allocation5 [shape = 'u8[196608]{0}', space=vmem, size = 0x30000, scoped, tag = 'input window, operand 1, single buffered']
    #allocation6 [shape = 's32[1]{0}', space=sflag, size = 0x4, scoped, tag = 'scoped memory for tpu_custom_call.1']
    #allocation7 [shape = 'u8[16384]{0}', space=vmem, size = 0x4000, scoped, tag = 'output window, operand 0']
    #allocation8 [shape = 'u8[2048]{0}', space=vmem, size = 0x800, scoped, tag = 'output window, operand 1']
    #allocation9 [shape = 's32[2]{0}', space=sflag, size = 0x8, scoped, tag = 'scoped memory for tpu_custom_call.1']
    %9 = vsyncpa [#allocation3], 0
    %s10 = scalar_lea.sflag [#allocation3], 1
    %11 = vsyncpa %s10, 0
    %12 = vsyncpa [#allocation6], 0
    %13 = vsyncpa [#allocation4], 0
    %s14 = scalar_lea.sflag [#allocation4], 1
    %15 = vsyncpa %s14, 0
    %16 = vsyncpa [#allocation9], 0
    %s17 = scalar_lea.sflag [#allocation9], 1
    %18 = vsyncpa %s17, 0
    loop: start=0, step=1, limit=4
    $region2: #{tpu_custom_call.1} parent=1 // loop_pre_header
      _
    $region3: #{tpu_custom_call.1} parent=1 // loop_header
      %s20 = sphi 0, %s24
      %p21 = scmp.ge.s32.totalorder %s20, 4
      %s30 = sphi 0, %s32
      %s33 = sphi 0, %s30
      %s34 = sphi 0, %s33
      %s50 = sphi 0, %s34
      %s54 = sphi 0, %s54
      %s56 = sphi 0, %s54
      %s57 = sphi 0, %s56
      %s71 = sphi 0, %s57
      %s77 = sphi 0, %s79
      %s80 = sphi 0, %s77
      %s81 = sphi 0, %s80
      %s97 = sphi 0, %s81
      %s103 = sphi 0, %s105
      %s106 = sphi 0, %s103
      %s107 = sphi 0, %s106
      %s123 = sphi 0, %s107
    $region4: #{tpu_custom_call.1} parent=1 // loop_header_branch
      %23 = sbr.rel (%p21) target = $region8
    $region5: #{tpu_custom_call.1} parent=1 // loop_body
      %s25 = ssub.s32 %s20, 1
      %s26 = ssub.s32 %s20, 2
      %s27 = sadd.s32 %s20, 1
      %s28 = ssub.s32 %s20, %s27
      %p29 = scmp.eq.s32.totalorder %s28, 0
      %s31 = sadd.s32 %s30, 1
      %s32 = scalar_select %p29, %s30, %s31
      %p35 = pneg %p29
      %p36 = scmp.eq.s32.totalorder %s20, 1
      %p37 = por %p35, %p36
      %p38 = scmp.ne.s32.totalorder %s30, %s33
      %p39 = scmp.eq.s32.totalorder %s20, 0
      %p40 = por %p38, %p39
      %p41 = scmp.ne.s32.totalorder %s30, %s33
      %p42 = scmp.eq.s32.totalorder %s25, 1
      %p43 = por %p41, %p42
      %p44 = scmp.ne.s32.totalorder %s33, %s34
      %p45 = scmp.eq.s32.totalorder %s25, 0
      %p46 = por %p44, %p45
      %p47 = scmp.ne.s32.totalorder %s33, %s34
      %p48 = scmp.eq.s32.totalorder %s26, 1
      %p49 = por %p47, %p48
      %p51 = scmp.ne.s32.totalorder %s34, %s50
      %p52 = scmp.eq.s32.totalorder %s26, 0
      %p53 = por %p51, %p52
      %s55 = sadd.s32 %s54, 1
      %p58 = scmp.eq.s32.totalorder %s20, 1
      %p59 = scmp.ne.s32.totalorder %s54, %s56
      %p60 = scmp.eq.s32.totalorder %s20, 0
      %p61 = por %p59, %p60
      %p62 = scmp.ne.s32.totalorder %s54, %s56
      %p63 = scmp.eq.s32.totalorder %s25, 1
      %p64 = por %p62, %p63
      %p65 = scmp.ne.s32.totalorder %s56, %s57
      %p66 = scmp.eq.s32.totalorder %s25, 0
      %p67 = por %p65, %p66
      %p68 = scmp.ne.s32.totalorder %s56, %s57
      %p69 = scmp.eq.s32.totalorder %s26, 1
      %p70 = por %p68, %p69
      %p72 = scmp.ne.s32.totalorder %s57, %s71
      %p73 = scmp.eq.s32.totalorder %s26, 0
      %p74 = por %p72, %p73
      %s75 = ssub.s32 %s20, %s27
      %p76 = scmp.eq.s32.totalorder %s75, 0
      %s78 = sadd.s32 %s77, 1
      %s79 = scalar_select %p76, %s77, %s78
      %p82 = pneg %p76
      %p83 = scmp.eq.s32.totalorder %s20, 1
      %p84 = por %p82, %p83
      %p85 = scmp.ne.s32.totalorder %s77, %s80
      %p86 = scmp.eq.s32.totalorder %s20, 0
      %p87 = por %p85, %p86
      %p88 = scmp.ne.s32.totalorder %s77, %s80
      %p89 = scmp.eq.s32.totalorder %s25, 1
      %p90 = por %p88, %p89
      %p91 = scmp.ne.s32.totalorder %s80, %s81
      %p92 = scmp.eq.s32.totalorder %s25, 0
      %p93 = por %p91, %p92
      %p94 = scmp.ne.s32.totalorder %s80, %s81
      %p95 = scmp.eq.s32.totalorder %s26, 1
      %p96 = por %p94, %p95
      %p98 = scmp.ne.s32.totalorder %s81, %s97
      %p99 = scmp.eq.s32.totalorder %s26, 0
      %p100 = por %p98, %p99
      %s101 = ssub.s32 %s20, %s27
      %p102 = scmp.eq.s32.totalorder %s101, 0
      %s104 = sadd.s32 %s103, 1
      %s105 = scalar_select %p102, %s103, %s104
      %p108 = pneg %p102
      %p109 = scmp.eq.s32.totalorder %s20, 1
      %p110 = por %p108, %p109
      %p111 = scmp.ne.s32.totalorder %s103, %s106
      %p112 = scmp.eq.s32.totalorder %s20, 0
      %p113 = por %p111, %p112
      %p114 = scmp.ne.s32.totalorder %s103, %s106
      %p115 = scmp.eq.s32.totalorder %s25, 1
      %p116 = por %p114, %p115
      %p117 = scmp.ne.s32.totalorder %s106, %s107
      %p118 = scmp.eq.s32.totalorder %s25, 0
      %p119 = por %p117, %p118
      %p120 = scmp.ne.s32.totalorder %s106, %s107
      %p121 = scmp.eq.s32.totalorder %s26, 1
      %p122 = por %p120, %p121
      %p124 = scmp.ne.s32.totalorder %s107, %s123
      %p125 = scmp.eq.s32.totalorder %s26, 0
      %p126 = por %p124, %p125
      %p127 = scmp.le.s32.totalorder 1, %s20
      %p128 = scmp.lt.s32.totalorder %s20, 3
      %p129 = pnand %p127, %p128
      %p130 = pneg %p129
      // Predicated region
      $region9: #{tpu_custom_call.1} parent=5 // pred_check
        _
      $region10: #{tpu_custom_call.1} parent=5 // pred_check_branch
        %132 = sbr.rel (%p129) target = $region12
      $region11: #{tpu_custom_call.1} parent=5 // pred_region
        %s133 = ssub.s32 %s20, 1
        // Predicated region
        $region13: #{tpu_custom_call.1} parent=11 // pred_check
          %p134 = pneg %p67
        $region14: #{tpu_custom_call.1} parent=11 // pred_check_branch
          %136 = sbr.rel (%p134) target = $region16
        $region15: #{tpu_custom_call.1} parent=11 // pred_region
          %s138 = ssub.s32 6144, 6144
          %139 = vsyncadd [#allocation6], %s138
          %s140 = sshll.u32 [#allocation5], 4
          %s141 = int_to_ptr.vmem [resolvable:$true] %s140
          %146 = dma.hbm_to_vmem [thread:$0]  %s1, 6144, %s141, [#allocation6], 128, 128, 8
        $region16: #{tpu_custom_call.1} parent=11 // pred_fallthru
          _
      $region12: #{tpu_custom_call.1} parent=5 // pred_fallthru
        _
      %p147 = scmp.lt.s32.totalorder %s20, 2
      // Predicated region
      $region17: #{tpu_custom_call.1} parent=5 // pred_check
        %p148 = pneg %p147
      $region18: #{tpu_custom_call.1} parent=5 // pred_check_branch
        %150 = sbr.rel (%p148) target = $region20
      $region19: #{tpu_custom_call.1} parent=5 // pred_region
        // Predicated region
        $region21: #{tpu_custom_call.1} parent=19 // pred_check
          %p151 = pneg %p40
        $region22: #{tpu_custom_call.1} parent=19 // pred_check_branch
          %153 = sbr.rel (%p151) target = $region24
        $region23: #{tpu_custom_call.1} parent=19 // pred_region
          %s154 = sand.u32 %s30, 1
          %s155 = scalar_lea.sflag [#allocation3], %s154
          %s156 = sand.u32 %s30, 1
          %s157 = smul.addr %s156, 16
          %s158 = scalar_lea.vmem [#allocation2], %s157
          %s160 = ssub.s32 256, 256
          %161 = vsyncadd %s155, %s160
          %s162 = smul.addr %s20, 2
          %s163 = smul.addr %s162, 128
          %s164 = scalar_lea.hbm %s0, %s163
          %s165 = sshll.u32 %s158, 4
          %s166 = int_to_ptr.vmem [resolvable:$true] %s165
          %171 = dma.hbm_to_vmem [thread:$0]  %s164, 256, %s166, %s155, 128, 128, 8
        $region24: #{tpu_custom_call.1} parent=19 // pred_fallthru
          _
      $region20: #{tpu_custom_call.1} parent=5 // pred_fallthru
        _
      %p172 = scmp.le.s32.totalorder 1, %s20
      %p173 = scmp.lt.s32.totalorder %s20, 3
      %p174 = pnand %p172, %p173
      %p175 = pneg %p174
      // Predicated region
      $region25: #{tpu_custom_call.1} parent=5 // pred_check
        _
      $region26: #{tpu_custom_call.1} parent=5 // pred_check_branch
        %177 = sbr.rel (%p174) target = $region28
      $region27: #{tpu_custom_call.1} parent=5 // pred_region
        %s178 = ssub.s32 %s20, 1
        %s179 = sand.u32 %s33, 1
        %s180 = scalar_lea.sflag [#allocation3], %s179
        %s181 = sand.u32 %s33, 1
        %s182 = smul.addr %s181, 16
        %s183 = scalar_lea.vmem [#allocation2], %s182
        // Predicated region
        $region29: #{tpu_custom_call.1} parent=27 // pred_check
          %p184 = pneg %p46
        $region30: #{tpu_custom_call.1} parent=27 // pred_check_branch
          %186 = sbr.rel (%p184) target = $region32
        $region31: #{tpu_custom_call.1} parent=27 // pred_region
          %187 = dma.done %s180, 256
        $region32: #{tpu_custom_call.1} parent=27 // pred_fallthru
          _
        // Predicated region
        $region33: #{tpu_custom_call.1} parent=27 // pred_check
          %p188 = pneg %p67
        $region34: #{tpu_custom_call.1} parent=27 // pred_check_branch
          %190 = sbr.rel (%p188) target = $region36
        $region35: #{tpu_custom_call.1} parent=27 // pred_region
          %191 = dma.done [#allocation6], 6144
        $region36: #{tpu_custom_call.1} parent=27 // pred_fallthru
          _
        %s192 = sand.u32 %s33, 1
        %s193 = scalar_lea.sflag [#allocation3], %s192
        %s194 = sand.u32 %s33, 1
        %s195 = smul.addr %s194, 16
        %s196 = scalar_lea.vmem [#allocation2], %s195
        %p197 = pneg %p46
        %p198 = pneg %p43
        %p199 = pneg %p67
        %p200 = pneg %p64
        %p201 = pneg %p93
        %p202 = pneg %p90
        %s203 = sand.u32 %s80, 1
        %s204 = scalar_lea.sflag [#allocation4], %s203
        %s205 = sand.u32 %s80, 1
        %s206 = smul.addr %s205, 16
        %s207 = scalar_lea.vmem [#allocation7], %s206
        %p208 = pneg %p119
        %p209 = pneg %p116
        %s210 = sand.u32 %s106, 1
        %s211 = scalar_lea.sflag [#allocation9], %s210
        %s212 = sand.u32 %s106, 1
        %s213 = smul.addr %s212, 2
        %s214 = scalar_lea.vmem [#allocation8], %s213
        %v215 = vld [vmem:[%s183] sm:$0xff]
        %v216 = vld [vmem:[%s183 + $0x8] sm:$0xff]
        %v217 = vrot.slane %v215, 7
        %v218 = vrot.slane %v216, 7
        %v219 = vlaneseq
        %v220 = vshrl.u32 %v219, 7
        %vm221 = vcmp.lt.s32.totalorder %v220, 1
        %v222 = vsel %vm221, %v217, %v218
        %v223 = vsel %vm221, %v218, %v217
        %v224 = vrot.slane %v215, 1
        %v225 = vrot.slane %v216, 1
        %vm226 = vcmp.lt.s32.totalorder %v220, 7
        %v227 = vsel %vm226, %v224, %v225
        %v228 = vsel %vm226, %v225, %v224
        %v229 = vadd.s32 %v220, 8
        %vm230 = vcmp.eq.s32.totalorder %v220, 0
        %vm231 = vcmp.eq.s32.totalorder %v229, 0
        %v232 = vsel %vm230, 0.0, %v223
        %v233 = vsel %vm231, 0.0, %v222
        %vm234 = vcmp.eq.s32.totalorder %v220, 15
        %vm235 = vcmp.eq.s32.totalorder %v229, 15
        %v236 = vsel %vm234, 0.0, %v227
        %v237 = vsel %vm235, 0.0, %v228
        %v238 = vld [vmem:[#allocation5] sm:$0xff]
        %v239 = vld [vmem:[#allocation5 + $0x8] sm:$0xff]
        %v240 = vld [vmem:[#allocation5 + $0x10] sm:$0xff]
        %v241 = vld [vmem:[#allocation5 + $0x18] sm:$0xff]
        %v242 = vld [vmem:[#allocation5 + $0x20] sm:$0xff]
        %v243 = vld [vmem:[#allocation5 + $0x28] sm:$0xff]
        %v244 = vld [vmem:[#allocation5 + $0x30] sm:$0xff]
        %v245 = vld [vmem:[#allocation5 + $0x38] sm:$0xff]
        %v246 = vld [vmem:[#allocation5 + $0x40] sm:$0xff]
        %v247 = vld [vmem:[#allocation5 + $0x48] sm:$0xff]
        %v248 = vld [vmem:[#allocation5 + $0x50] sm:$0xff]
        %v249 = vld [vmem:[#allocation5 + $0x58] sm:$0xff]
        %v250 = vld [vmem:[#allocation5 + $0x60] sm:$0xff]
        %v251 = vld [vmem:[#allocation5 + $0x68] sm:$0xff]
        %v252 = vld [vmem:[#allocation5 + $0x70] sm:$0xff]
        %v253 = vld [vmem:[#allocation5 + $0x78] sm:$0xff]
        %v254 = vld [vmem:[#allocation5 + $0x80] sm:$0xff]
        %v255 = vld [vmem:[#allocation5 + $0x88] sm:$0xff]
        %v256 = vld [vmem:[#allocation5 + $0x90] sm:$0xff]
        %v257 = vld [vmem:[#allocation5 + $0x98] sm:$0xff]
        %v258 = vld [vmem:[#allocation5 + $0xa0] sm:$0xff]
        %v259 = vld [vmem:[#allocation5 + $0xa8] sm:$0xff]
        %v260 = vld [vmem:[#allocation5 + $0xb0] sm:$0xff]
        %v261 = vld [vmem:[#allocation5 + $0xb8] sm:$0xff]
        %v262 = vld [vmem:[#allocation5 + $0xc0] sm:$0xff]
        %v263 = vld [vmem:[#allocation5 + $0xc8] sm:$0xff]
        %v264 = vld [vmem:[#allocation5 + $0xd0] sm:$0xff]
        %v265 = vld [vmem:[#allocation5 + $0xd8] sm:$0xff]
        %v266 = vld [vmem:[#allocation5 + $0xe0] sm:$0xff]
        %v267 = vld [vmem:[#allocation5 + $0xe8] sm:$0xff]
        %v268 = vld [vmem:[#allocation5 + $0xf0] sm:$0xff]
        %v269 = vld [vmem:[#allocation5 + $0xf8] sm:$0xff]
        %v270 = vld [vmem:[#allocation5 + $0x100] sm:$0xff]
        %v271 = vld [vmem:[#allocation5 + $0x108] sm:$0xff]
        %v272 = vld [vmem:[#allocation5 + $0x110] sm:$0xff]
        %v273 = vld [vmem:[#allocation5 + $0x118] sm:$0xff]
        %v274 = vld [vmem:[#allocation5 + $0x120] sm:$0xff]
        %v275 = vld [vmem:[#allocation5 + $0x128] sm:$0xff]
        %v276 = vld [vmem:[#allocation5 + $0x130] sm:$0xff]
        %v277 = vld [vmem:[#allocation5 + $0x138] sm:$0xff]
        %v278 = vld [vmem:[#allocation5 + $0x140] sm:$0xff]
        %v279 = vld [vmem:[#allocation5 + $0x148] sm:$0xff]
        %v280 = vld [vmem:[#allocation5 + $0x150] sm:$0xff]
        %v281 = vld [vmem:[#allocation5 + $0x158] sm:$0xff]
        %v282 = vld [vmem:[#allocation5 + $0x160] sm:$0xff]
        %v283 = vld [vmem:[#allocation5 + $0x168] sm:$0xff]
        %v284 = vld [vmem:[#allocation5 + $0x170] sm:$0xff]
        %v285 = vld [vmem:[#allocation5 + $0x178] sm:$0xff]
        %286 = vmatprep.subr.mxu0 0.0
        %287 = vmatpush1.msra.mxu0 %v238
        %288 = vmatprep.subr.mxu0 0.0
        %289 = vmatpush1.msra.mxu0 %v239
        %290 = vmatprep.subr.mxu0 0.0
        %291 = vmatpush1.msra.mxu0 %v240
        %292 = vmatprep.subr.mxu0 0.0
        %293 = vmatpush1.msra.mxu0 %v241
        %294 = vmatprep.subr.mxu0 0.0
        %295 = vmatpush1.msra.mxu0 %v242
        %296 = vmatprep.subr.mxu0 0.0
        %297 = vmatpush1.msra.mxu0 %v243
        %298 = vmatprep.subr.mxu0 0.0
        %299 = vmatpush1.msra.mxu0 %v244
        %300 = vmatprep.subr.mxu0 0.0
        %301 = vmatpush1.msra.mxu0 %v245
        %302 = vmatprep.subr.mxu0 0.0
        %303 = vmatpush1.msra.mxu0 %v246
        %304 = vmatprep.subr.mxu0 0.0
        %305 = vmatpush1.msra.mxu0 %v247
        %306 = vmatprep.subr.mxu0 0.0
        %307 = vmatpush1.msra.mxu0 %v248
        %308 = vmatprep.subr.mxu0 0.0
        %309 = vmatpush1.msra.mxu0 %v249
        %310 = vmatprep.subr.mxu0 0.0
        %311 = vmatpush1.msra.mxu0 %v250
        %312 = vmatprep.subr.mxu0 0.0
        %313 = vmatpush1.msra.mxu0 %v251
        %314 = vmatprep.subr.mxu0 0.0
        %315 = vmatpush1.msra.mxu0 %v252
        %316 = vmatprep.subr.mxu0 0.0
        %317 = vmatpush1.msra.mxu0 %v253
        %318 = vmatprep.subr.mxu0 0.0
        %319 = vmatpush1.msra.mxu0 %v254
        %320 = vmatprep.subr.mxu0 0.0
        %321 = vmatpush1.msra.mxu0 %v255
        %322 = vmatprep.subr.mxu0 0.0
        %323 = vmatpush1.msra.mxu0 %v256
        %324 = vmatprep.subr.mxu0 0.0
        %325 = vmatpush1.msra.mxu0 %v257
        %326 = vmatprep.subr.mxu0 0.0
        %327 = vmatpush1.msra.mxu0 %v258
        %328 = vmatprep.subr.mxu0 0.0
        %329 = vmatpush1.msra.mxu0 %v259
        %330 = vmatprep.subr.mxu0 0.0
        %331 = vmatpush1.msra.mxu0 %v260
        %332 = vmatprep.subr.mxu0 0.0
        %333 = vmatpush1.msra.mxu0 %v261
        %334 = vmatprep.subr.mxu0 0.0
        %335 = vmatpush1.msra.mxu0 %v262
        %336 = vmatprep.subr.mxu0 0.0
        %337 = vmatpush1.msra.mxu0 %v263
        %338 = vmatprep.subr.mxu0 0.0
        %339 = vmatpush1.msra.mxu0 %v264
        %340 = vmatprep.subr.mxu0 0.0
        %341 = vmatpush1.msra.mxu0 %v265
        %342 = vmatprep.subr.mxu0 0.0
        %343 = vmatpush1.msra.mxu0 %v266
        %344 = vmatprep.subr.mxu0 0.0
        %345 = vmatpush1.msra.mxu0 %v267
        %346 = vmatprep.subr.mxu0 0.0
        %347 = vmatpush1.msra.mxu0 %v268
        %348 = vmatprep.subr.mxu0 0.0
        %349 = vmatpush1.msra.mxu0 %v269
        %350 = vmatprep.mubr.f32.mxu0 %v215
        %351 = vmatmul.mubr.f32.gmra.mrb[0].mxu0 %v232
        %v352 = vpop.f32.mrb[0].mxu0
        %v353 = vadd.f32 0.0, %v352
        %v354 = vpop.f32.mrb[0].mxu0
        %355 = vmatprep.mubr.f32.mxu0 %v216
        %356 = vmatmul.mubr.f32.gmra.mrb[0].mxu0 %v233
        %v357 = vpop.f32.mrb[0].mxu0
        %v358 = vadd.f32 0.0, %v357
        %v359 = vpop.f32.mrb[0].mxu0
        %360 = vdwg.mxu0
        %361 = vmatprep.subr.mxu0 0.0
        %362 = vmatpush1.msra.mxu0 %v270
        %363 = vmatprep.subr.mxu0 0.0
        %364 = vmatpush1.msra.mxu0 %v271
        %365 = vmatprep.subr.mxu0 0.0
        %366 = vmatpush1.msra.mxu0 %v272
        %367 = vmatprep.subr.mxu0 0.0
        %368 = vmatpush1.msra.mxu0 %v273
        %369 = vmatprep.subr.mxu0 0.0
        %370 = vmatpush1.msra.mxu0 %v274
        %371 = vmatprep.subr.mxu0 0.0
        %372 = vmatpush1.msra.mxu0 %v275
        %373 = vmatprep.subr.mxu0 0.0
        %374 = vmatpush1.msra.mxu0 %v276
        %375 = vmatprep.subr.mxu0 0.0
        %376 = vmatpush1.msra.mxu0 %v277
        %377 = vmatprep.subr.mxu0 0.0
        %378 = vmatpush1.msra.mxu0 %v278
        %379 = vmatprep.subr.mxu0 0.0
        %380 = vmatpush1.msra.mxu0 %v279
        %381 = vmatprep.subr.mxu0 0.0
        %382 = vmatpush1.msra.mxu0 %v280
        %383 = vmatprep.subr.mxu0 0.0
        %384 = vmatpush1.msra.mxu0 %v281
        %385 = vmatprep.subr.mxu0 0.0
        %386 = vmatpush1.msra.mxu0 %v282
        %387 = vmatprep.subr.mxu0 0.0
        %388 = vmatpush1.msra.mxu0 %v283
        %389 = vmatprep.subr.mxu0 0.0
        %390 = vmatpush1.msra.mxu0 %v284
        %391 = vmatprep.subr.mxu0 0.0
        %392 = vmatpush1.msra.mxu0 %v285
        %393 = vmatprep.subr.mxu0 0.0
        %394 = vmatpush1.msra.mxu0 0.0
        %395 = vmatprep.subr.mxu0 0.0
        %396 = vmatpush1.msra.mxu0 0.0
        %397 = vmatprep.subr.mxu0 0.0
        %398 = vmatpush1.msra.mxu0 0.0
        %399 = vmatprep.subr.mxu0 0.0
        %400 = vmatpush1.msra.mxu0 0.0
        %401 = vmatprep.subr.mxu0 0.0
        %402 = vmatpush1.msra.mxu0 0.0
        %403 = vmatprep.subr.mxu0 0.0
        %404 = vmatpush1.msra.mxu0 0.0
        %405 = vmatprep.subr.mxu0 0.0
        %406 = vmatpush1.msra.mxu0 0.0
        %407 = vmatprep.subr.mxu0 0.0
        %408 = vmatpush1.msra.mxu0 0.0
        %409 = vmatprep.subr.mxu0 0.0
        %410 = vmatpush1.msra.mxu0 0.0
        %411 = vmatprep.subr.mxu0 0.0
        %412 = vmatpush1.msra.mxu0 0.0
        %413 = vmatprep.subr.mxu0 0.0
        %414 = vmatpush1.msra.mxu0 0.0
        %415 = vmatprep.subr.mxu0 0.0
        %416 = vmatpush1.msra.mxu0 0.0
        %417 = vmatprep.subr.mxu0 0.0
        %418 = vmatpush1.msra.mxu0 0.0
        %419 = vmatprep.subr.mxu0 0.0
        %420 = vmatpush1.msra.mxu0 0.0
        %421 = vmatprep.subr.mxu0 0.0
        %422 = vmatpush1.msra.mxu0 0.0
        %423 = vmatprep.subr.mxu0 0.0
        %424 = vmatpush1.msra.mxu0 0.0
        %425 = vmatprep.mubr.f32.mxu0 0.0
        %426 = vmatmul.mubr.f32.gmra.mrb[0].mxu0 %v236
        %v427 = vpop.f32.mrb[0].mxu0
        %v428 = vadd.f32 %v353, %v427
        %v429 = vpop.f32.mrb[0].mxu0
        %430 = vmatprep.mubr.f32.mxu0 0.0
        %431 = vmatmul.mubr.f32.gmra.mrb[0].mxu0 %v237
        %v432 = vpop.f32.mrb[0].mxu0
        %v433 = vadd.f32 %v358, %v432
        %v434 = vpop.f32.mrb[0].mxu0
        %435 = vdwg.mxu0
        %436 = vst [vmem:[%s207] sm:$0xff] %v428
        %437 = vst [vmem:[%s207 + $0x8] sm:$0xff] %v433
        %v438 = vadd.f32 %v428, %v433
        %v439 = vrot.slane %v438, 4
        %v440 = vadd.f32 %v438, %v439
        %v441 = vrot.slane %v440, 2
        %v442 = vadd.f32 %v440, %v441
        %v443 = vrot.slane %v442, 1
        %v444 = vadd.f32 %v442, %v443
        %v445 = vmul.f32 %v428, %v428
        %v446 = vmul.f32 %v433, %v433
        %v447 = vadd.f32 %v445, %v446
        %v448 = vrot.slane %v447, 4
        %v449 = vadd.f32 %v447, %v448
        %v450 = vrot.slane %v449, 2
        %v451 = vadd.f32 %v449, %v450
        %v452 = vrot.slane %v451, 1
        %v453 = vadd.f32 %v451, %v452
        %vm454 = vcmask 1040384
        %v455 = vsel %vm454, %v444, %v453
        %456 = vst [vmem:[%s214] sm:$0x3] %v455
        %s457 = sand.u32 %s80, 1
        %s458 = scalar_lea.sflag [#allocation4], %s457
        %s459 = sand.u32 %s80, 1
        %s460 = smul.addr %s459, 16
        %s461 = scalar_lea.vmem [#allocation7], %s460
        %s462 = sand.u32 %s106, 1
        %s463 = scalar_lea.sflag [#allocation9], %s462
        %s464 = sand.u32 %s106, 1
        %s465 = smul.addr %s464, 2
        %s466 = scalar_lea.vmem [#allocation8], %s465
        // Predicated region
        $region37: #{tpu_custom_call.1} parent=27 // pred_check
          %p467 = pneg %p90
        $region38: #{tpu_custom_call.1} parent=27 // pred_check_branch
          %469 = sbr.rel (%p467) target = $region40
        $region39: #{tpu_custom_call.1} parent=27 // pred_region
          %s471 = ssub.s32 256, 256
          %472 = vsyncadd %s458, %s471
          %s473 = smul.addr %s25, 2
          %s474 = smul.addr %s473, 128
          %s475 = scalar_lea.hbm %s2, %s474
          %s476 = sshll.u32 %s461, 4
          %s477 = int_to_ptr.vmem [resolvable:$true] %s476
          %482 = dma.vmem_to_hbm [thread:$0]  %s477, 256, %s475, %s458, 128, 128, 8
        $region40: #{tpu_custom_call.1} parent=27 // pred_fallthru
          _
        // Predicated region
        $region41: #{tpu_custom_call.1} parent=27 // pred_check
          %p483 = pneg %p116
        $region42: #{tpu_custom_call.1} parent=27 // pred_check_branch
          %485 = sbr.rel (%p483) target = $region44
        $region43: #{tpu_custom_call.1} parent=27 // pred_region
          %s487 = ssub.s32 32, 32
          %488 = vsyncadd %s463, %s487
          %s489 = smul.addr %s25, 32
          %s490 = scalar_lea.hbm %s3, %s489
          %s492 = sshll.u32 %s466, 4
          %s493 = int_to_ptr.vmem [resolvable:$true] %s492
          %495 = dma.vmem_to_hbm [thread:$0]  %s493, 32, %s490, %s463
        $region44: #{tpu_custom_call.1} parent=27 // pred_fallthru
          _
      $region28: #{tpu_custom_call.1} parent=5 // pred_fallthru
        _
      %p496 = scmp.le.s32.totalorder 2, %s20
      // Predicated region
      $region45: #{tpu_custom_call.1} parent=5 // pred_check
        %p497 = pneg %p496
      $region46: #{tpu_custom_call.1} parent=5 // pred_check_branch
        %499 = sbr.rel (%p497) target = $region48
      $region47: #{tpu_custom_call.1} parent=5 // pred_region
        %s500 = ssub.s32 %s20, 2
        // Predicated region
        $region49: #{tpu_custom_call.1} parent=47 // pred_check
          %p501 = pneg %p96
        $region50: #{tpu_custom_call.1} parent=47 // pred_check_branch
          %503 = sbr.rel (%p501) target = $region52
        $region51: #{tpu_custom_call.1} parent=47 // pred_region
          %s504 = sand.u32 %s81, 1
          %s505 = scalar_lea.sflag [#allocation4], %s504
          %s506 = sand.u32 %s81, 1
          %s507 = smul.addr %s506, 16
          %s508 = scalar_lea.vmem [#allocation7], %s507
          %509 = dma.done %s505, 256
        $region52: #{tpu_custom_call.1} parent=47 // pred_fallthru
          _
        // Predicated region
        $region53: #{tpu_custom_call.1} parent=47 // pred_check
          %p510 = pneg %p122
        $region54: #{tpu_custom_call.1} parent=47 // pred_check_branch
          %512 = sbr.rel (%p510) target = $region56
        $region55: #{tpu_custom_call.1} parent=47 // pred_region
          %s513 = sand.u32 %s107, 1
          %s514 = scalar_lea.sflag [#allocation9], %s513
          %s515 = sand.u32 %s107, 1
          %s516 = smul.addr %s515, 2
          %s517 = scalar_lea.vmem [#allocation8], %s516
          %518 = dma.done %s514, 32
        $region56: #{tpu_custom_call.1} parent=47 // pred_fallthru
          _
      $region48: #{tpu_custom_call.1} parent=5 // pred_fallthru
        _
    $region6: #{tpu_custom_call.1} parent=1 // loop_footer
      %s24 = sadd.s32 1, %s20
    $region7: #{tpu_custom_call.1} parent=1 // loop_footer_branch
      %19 = sbr.rel target = $region3
    $region8: #{tpu_custom_call.1} parent=1 // loop_exit
      _
    %519 = vsyncpa [#allocation3], 1
    %s520 = scalar_lea.sflag [#allocation3], 1
    %521 = vsyncpa %s520, 1
    %522 = vsyncpa [#allocation6], 1
    %523 = vsyncpa [#allocation4], 1
    %s524 = scalar_lea.sflag [#allocation4], 1
    %525 = vsyncpa %s524, 1
    %526 = vsyncpa [#allocation9], 1
    %s527 = scalar_lea.sflag [#allocation9], 1
    %528 = vsyncpa %s527, 1

</llo_original>
